<compile_context>
chip_gen: v7x
topology: tpu7x:2x2x1
jax: 0.10.0
libtpu: 0.0.40
codegen_flags: <defaults>
</compile_context>

<pallas_src>
import jax
import jax.numpy as jnp
from jax import lax
from jax.experimental import pallas as pl
from jax.experimental.pallas import tpu as pltpu

_LANES = 128
_MAX_TILE_ROWS = 8192          # (8192, 128) f32 block = 4 MiB per input
_WMSE_INPUT_BUDGET = 24 << 20  # bytes for all double-buffered WMSE input blocks
_GAN_INPUT_BUDGET = 12 << 20   # bytes for double-buffered GAN input blocks
_GAN_TK_CAP = 8192
_GAN_TR_CAP = 512


def _cdiv(a, b):
    return -(-a // b)


def _round_down(x, m):
    return max(m, (x // m) * m)


# ---------------------------------------------------------------------------
# Chip-aware trace-time queries (defensive: fall back to safe defaults).
# ---------------------------------------------------------------------------
def _vmem_capacity_bytes():
    try:
        v = getattr(pltpu.get_tpu_info(), "vmem_capacity_bytes", None)
        if isinstance(v, int) and v > 0:
            return v
    except Exception:
        pass
    return 64 << 20          # conservative (v7x per-core VMEM)


def _vmem_limit_bytes():
    return int(min(_vmem_capacity_bytes() * 3 // 4, 48 << 20))


def _num_tensorcores():
    # Only enable a core-split axis on chips that actually expose >1
    # TensorCore per device (megacore v4/v5p, v7x-class).  On v5e/v6e a
    # second grid axis would be a pure serial loop.
    try:
        kind = jax.devices()[0].device_kind.lower()
        if ("v4" in kind) or ("v5p" in kind) or ("v7" in kind):
            return 2
    except Exception:
        pass
    return 1


# ---------------------------------------------------------------------------
# Weighted-MSE partial-stats kernel (tiled, pipelined, VPU accumulation).
# Resident output block (n_stats, fold, 128):
#   stat 0: sum(scaled * [w > 0])   stat 1: count(w > 0)
#   stat 2: sum(scaled)             stat 3: count(scaled != 0)
# ---------------------------------------------------------------------------
def _make_wmse_kernel(rows, tile_rows, tpc, n_tiles, fold, has_weights,
                      need_row_mask, need_gate):
    groups = tile_rows // fold

    def fold_sum(x):
        # (tile_rows, 128) -> (fold, 128): splits the sublane axis on an
        # (8,128)-tile boundary -> pure vreg-wise VPU adds, no relayout.
        return x.reshape(groups, fold, _LANES).sum(axis=0)

    def kernel(*refs):
        if has_weights:
            pred_ref, gt_ref, w_ref, out_ref = refs
        else:
            pred_ref, gt_ref, out_ref = refs
        c = pl.program_id(0)
        i = pl.program_id(1)

        @pl.when(i == 0)
        def _():
            out_ref[...] = jnp.zeros_like(out_ref)

        p = pred_ref[...].astype(jnp.float32)
        g = gt_ref[...].astype(jnp.float32)
        diff = p - g
        sq = diff * diff
        if has_weights:
            w = w_ref[...].astype(jnp.float32)
            scaled = w * sq
        else:
            w = None
            scaled = sq

        def accumulate(scaled_v, w_v):
            if has_weights:
                wpos = w_v > 0.0
                out_ref[0] += fold_sum(jnp.where(wpos, scaled_v, 0.0))
                out_ref[1] += fold_sum(jnp.where(wpos, 1.0, 0.0))
                out_ref[2] += fold_sum(scaled_v)
                out_ref[3] += fold_sum(jnp.where(scaled_v != 0.0, 1.0, 0.0))
            else:
                out_ref[0] += fold_sum(scaled_v)

        if not need_gate:
            accumulate(scaled, w)
        else:
            t = c * tpc + i
            last = n_tiles - 1

            @pl.when(t < last)
            def _():
                accumulate(scaled, w)          # fast path: no iota, no selects

            @pl.when(t == last)
            def _():
                if need_row_mask:
                    row_ids = (lax.broadcasted_iota(
                        jnp.int32, (tile_rows, _LANES), 0) + last * tile_rows)
                    valid = row_ids < rows
                    accumulate(jnp.where(valid, scaled, 0.0),
                               jnp.where(valid, w, 0.0) if has_weights else None)
                else:
                    accumulate(scaled, w)
            # t > last (duplicated clamped tiles on the core split): skip.

    return kernel


def _wmse_bulk_stats(p2d, g2d, w2d, has_weights):
    rows = p2d.shape[0]
    n_stats = 4 if has_weights else 1

    dts = [p2d.dtype, g2d.dtype] + ([w2d.dtype] if has_weights else [])
    bytes_per_row = sum(2 * _LANES * d.itemsize for d in dts)   # double-buffered
    in_budget = min(_WMSE_INPUT_BUDGET, _vmem_capacity_bytes() // 3)
    cap_rows = _round_down(min(_MAX_TILE_ROWS, in_budget // bytes_per_row), 32)

    tile_rows = rows if rows <= cap_rows else cap_rows
    n_tiles = _cdiv(rows, tile_rows)
    nc = min(_num_tensorcores(), n_tiles)
    tpc = _cdiv(n_tiles, nc)
    fold = 8 if tile_rows % 8 == 0 else tile_rows

    need_row_mask = (rows % tile_rows) != 0
    need_gate = need_row_mask or (nc * tpc != n_tiles)

    kernel = _make_wmse_kernel(rows, tile_rows, tpc, n_tiles, fold,
                               has_weights, need_row_mask, need_gate)

    def in_map(c, i):
        # Clamp so DMAs for duplicated trailing tiles stay in bounds; their
        # contribution is skipped inside the kernel via the pl.when gate.
        return (jnp.minimum(c * tpc + i, n_tiles - 1), 0)

    inputs = (p2d, g2d, w2d) if has_weights else (p2d, g2d)
    # TODO(synk): on v7x, if the leading "parallel" axis is not actually split
    # across the two TensorCores, switch it to pltpu.CORE_PARALLEL.
    lead_sem = "parallel" if nc > 1 else "arbitrary"

    out = pl.pallas_call(
        kernel,
        out_shape=jax.ShapeDtypeStruct((nc, n_stats, fold, _LANES), jnp.float32),
        grid=(nc, tpc),
        in_specs=[pl.BlockSpec((tile_rows, _LANES), in_map) for _ in inputs],
        out_specs=pl.BlockSpec((None, n_stats, fold, _LANES),
                               lambda c, i: (c, 0, 0, 0)),
        compiler_params=pltpu.CompilerParams(
            dimension_semantics=(lead_sem, "arbitrary"),
            vmem_limit_bytes=_vmem_limit_bytes()),
    )(*inputs)
    # Single tiny cross-lane reduction in the epilogue (outside the hot loop).
    return out.sum(axis=(0, 2, 3))              # (n_stats,)


def _weighted_mse(pred, gt, weights):
    """Reproduces torch semantics of Weighted_GMSELoss._calc_loss."""
    has_weights = weights is not None
    n = int(pred.size)
    fp = pred.reshape(-1)
    fg = gt.reshape(-1)
    fw = weights.reshape(-1) if has_weights else None

    rows = n // _LANES
    rem = n - rows * _LANES
    n_stats = 4 if has_weights else 1
    stats = [jnp.float32(0.0) for _ in range(n_stats)]

    if rows > 0:
        bulk = rows * _LANES
        if rem == 0:
            # Pure view: no HBM copy.
            p2d, g2d = fp.reshape(rows, _LANES), fg.reshape(rows, _LANES)
            w2d = fw.reshape(rows, _LANES) if has_weights else None
        else:
            # TODO(synk): this prefix slice materializes a copy of each input
            # when n % 128 != 0; a zero-copy alternative is to pass the flat
            # arrays via memory_space=pl.ANY and DMA/mask the ragged tail
            # inside the kernel.
            p2d = fp[:bulk].reshape(rows, _LANES)
            g2d = fg[:bulk].reshape(rows, _LANES)
            w2d = fw[:bulk].reshape(rows, _LANES) if has_weights else None
        part = _wmse_bulk_stats(p2d, g2d, w2d, has_weights)
        stats = [s + part[idx] for idx, s in enumerate(stats)]

    if rem > 0:  # ragged tail (< 128 elems): negligible pure-jnp epilogue
        tp = fp[rows * _LANES:].astype(jnp.float32)
        tg = fg[rows * _LANES:].astype(jnp.float32)
        d = tp - tg
        sq = d * d
        if has_weights:
            tw = fw[rows * _LANES:].astype(jnp.float32)
            sc = tw * sq
            stats[0] = stats[0] + jnp.sum(jnp.where(tw > 0.0, sc, 0.0))
            stats[1] = stats[1] + jnp.sum((tw > 0.0).astype(jnp.float32))
            stats[2] = stats[2] + jnp.sum(sc)
            stats[3] = stats[3] + jnp.sum((sc != 0.0).astype(jnp.float32))
        else:
            stats[0] = stats[0] + jnp.sum(sq)

    if has_weights:
        masked_mean = stats[0] / stats[1]          # NaN iff empty mask (torch too)
        full_mean = stats[2] / jnp.float32(n)
        return jnp.where(stats[3] > 0.0, masked_mean, full_mean)
    return stats[0] / jnp.float32(n)


# ---------------------------------------------------------------------------
# Discriminator (single linear layer) scores: VPU broadcast-mul + lane-dense
# fold into a (2, rows, 128) accumulator.  No MXU, no per-tile XLU reduce.
# ---------------------------------------------------------------------------
def _make_gan_kernel(feat_used, tk, tr, need_col_mask):
    folds = tk // _LANES

    def kernel(real_ref, fake_ref, w_ref, out_ref):
        k = pl.program_id(1)

        @pl.when(k == 0)
        def _():
            out_ref[...] = jnp.zeros_like(out_ref)

        w_row = w_ref[...].astype(jnp.float32)              # (1, tk)
        pr = real_ref[...].astype(jnp.float32) * w_row       # (tr, tk)
        pf = fake_ref[...].astype(jnp.float32) * w_row
        if need_col_mask:
            col = lax.broadcasted_iota(jnp.int32, (tr, tk), 1) + k * tk
            cvalid = col < feat_used
            pr = jnp.where(cvalid, pr, 0.0)
            pf = jnp.where(cvalid, pf, 0.0)
        # Lane-dense fold: add 128-wide column tiles (vreg-wise VPU adds);
        # the single cross-lane reduction happens once in the jnp epilogue.
        r128 = pr[:, 0:_LANES]
        f128 = pf[:, 0:_LANES]
        for f in range(1, folds):
            r128 = r128 + pr[:, f * _LANES:(f + 1) * _LANES]
            f128 = f128 + pf[:, f * _LANES:(f + 1) * _LANES]
        out_ref[0] += r128
        out_ref[1] += f128

    return kernel


def _gan_loss(gt_enhanced, pred_enhanced, disc_w, disc_b):
    # TODO(synk): the reference discriminator is an arbitrary nn.Module;
    # modeled here as a single linear layer (features -> 1 score).
    n_rows = gt_enhanced.shape[0]
    feat = int(gt_enhanced.size) // n_rows
    real = gt_enhanced.reshape(n_rows, feat)
    fake = pred_enhanced.reshape(n_rows, feat)
    w_row = disc_w.reshape(1, feat)

    feat_used = feat
    if feat % _LANES != 0:
        # Rare ragged corner: pad features to a lane multiple (zeros in the
        # weight row kill the padded columns).
        pad = _LANES - feat % _LANES
        real = jnp.pad(real, ((0, 0), (0, pad)))
        fake = jnp.pad(fake, ((0, 0), (0, pad)))
        w_row = jnp.pad(w_row, ((0, 0), (0, pad)))
        feat_used = feat + pad

    # Row tiling (split across rows when the batch is large; rows are
    # independent so this axis is "parallel").
    if n_rows > _GAN_TR_CAP and n_rows % 8 == 0:
        tr = _GAN_TR_CAP
    else:
        tr = n_rows
    n_r = _cdiv(n_rows, tr)

    # Feature tile budgeted from VMEM (double-buffered real+fake blocks).
    per_col_bytes = 2 * tr * (real.dtype.itemsize + fake.dtype.itemsize)
    tk_cap = _round_down(min(_GAN_TK_CAP, _GAN_INPUT_BUDGET // per_col_bytes),
                         _LANES)
    tk = min(feat_used, tk_cap)
    n_k = _cdiv(feat_used, tk)
    need_col_mask = (feat_used % tk) != 0

    kernel = _make_gan_kernel(feat_used, tk, tr, need_col_mask)
    acc = pl.pallas_call(
        kernel,
        out_shape=jax.ShapeDtypeStruct((2, n_rows, _LANES), jnp.float32),
        grid=(n_r, n_k),
        in_specs=[pl.BlockSpec((tr, tk), lambda r, k: (r, k)),
                  pl.BlockSpec((tr, tk), lambda r, k: (r, k)),
                  pl.BlockSpec((1, tk), lambda r, k: (0, k))],
        out_specs=pl.BlockSpec((2, tr, _LANES), lambda r, k: (0, r, 0)),
        compiler_params=pltpu.CompilerParams(
            dimension_semantics=("parallel" if n_r > 1 else "arbitrary",
                                 "arbitrary"),
            vmem_limit_bytes=_vmem_limit_bytes()),
    )(real, fake, w_row)

    b = disc_b.reshape(()).astype(jnp.float32)
    scores = acc.sum(axis=-1) + b                 # (2, n_rows)
    r_scores, f_scores = scores[0], scores[1]
    return jnp.mean((r_scores - 1.0) ** 2) + jnp.mean(f_scores * f_scores)


# ---------------------------------------------------------------------------
# Full forward pass.
# ---------------------------------------------------------------------------
def weighted_gmse_loss(pred_lsds, gt_lsds, lsds_weights,
                       pred_affs, gt_affs, affs_weights,
                       pred_enhanced, gt_enhanced,
                       disc_w, disc_b,
                       aff_lambda=1.0, gan_lambda=1.0):
    # TODO(synk): the lsds and affs reductions are independent streaming
    # passes; they could be fused into one pallas_call (stacked stat
    # accumulators) to halve launch/ramp overhead on small tensors.
    lsd_loss = _weighted_mse(pred_lsds, gt_lsds, lsds_weights)
    aff_loss = aff_lambda * _weighted_mse(pred_affs, gt_affs, affs_weights)
    if gt_enhanced is not None and pred_enhanced is not None:
        gan_loss = gan_lambda * _gan_loss(gt_enhanced, pred_enhanced,
                                          disc_w, disc_b)
    else:
        gan_loss = 0.0
    return lsd_loss + aff_loss + gan_loss


if __name__ == "__main__":
    key = jax.random.PRNGKey(0)
    ks = jax.random.split(key, 10)

    B, H, W = 2, 16, 16
    C_LSD, C_AFF, C_ENH = 6, 3, 1

    pred_lsds = jax.random.normal(ks[0], (B, C_LSD, H, W), jnp.float32)
    gt_lsds = jax.random.normal(ks[1], (B, C_LSD, H, W), jnp.float32)
    lsds_weights = (jax.random.uniform(ks[2], (B, C_LSD, H, W)) > 0.3).astype(
        jnp.float32) * jax.random.uniform(ks[3], (B, C_LSD, H, W))

    pred_affs = jax.random.normal(ks[4], (B, C_AFF, H, W), jnp.float32)
    gt_affs = jax.random.normal(ks[5], (B, C_AFF, H, W), jnp.float32)
    affs_weights = (jax.random.uniform(ks[6], (B, C_AFF, H, W)) > 0.3).astype(
        jnp.float32) * jax.random.uniform(ks[7], (B, C_AFF, H, W))

    pred_enhanced = jax.random.normal(ks[8], (B, C_ENH, H, W), jnp.float32)
    gt_enhanced = jax.random.normal(ks[9], (B, C_ENH, H, W), jnp.float32)

    # Deterministic synthetic discriminator parameters (single linear layer).
    feat = C_ENH * H * W
    disc_w = (jax.random.normal(jax.random.PRNGKey(42), (feat, 1), jnp.float32)
              * 0.02)
    disc_b = jnp.zeros((1,), jnp.float32)

    loss_fn = jax.jit(lambda *a: weighted_gmse_loss(*a, aff_lambda=1.0,
                                                    gan_lambda=1.0))
    loss = loss_fn(pred_lsds, gt_lsds, lsds_weights,
                   pred_affs, gt_affs, affs_weights,
                   pred_enhanced, gt_enhanced, disc_w, disc_b)
    jax.block_until_ready(loss)
    assert loss.shape == () and jnp.isfinite(loss)
    print("KERNEL_OK")
</pallas_src>

<mosaic_0001>
module attributes {stable_mosaic.version = 11 : i64} {
  func.func @kernel(%arg0: i32, %arg1: i32, %arg2: memref<12x128xf32, #tpu.memory_space<vmem>>, %arg3: memref<12x128xf32, #tpu.memory_space<vmem>>, %arg4: memref<12x128xf32, #tpu.memory_space<vmem>>, %arg5: memref<1x4x12x128xf32, #tpu.memory_space<vmem>>) attributes {dimension_semantics = [#tpu.dimension_semantics<arbitrary>, #tpu.dimension_semantics<arbitrary>], iteration_bounds = array<i64: 1, 1>, scalar_prefetch = 0 : i64, scratch_operands = 0 : i64, tpu.core_type = #tpu.core_type<tc>, window_params = [{transform_indices = @transform_0, window_bounds = array<i64: 12, 128>}, {transform_indices = @transform_1, window_bounds = array<i64: 12, 128>}, {transform_indices = @transform_2, window_bounds = array<i64: 12, 128>}, {transform_indices = @transform_3, window_bounds = array<i64: 1, 4, 12, 128>}]} {
    %c0_i32 = arith.constant 0 : i32
    %0 = arith.cmpi eq, %arg1, %c0_i32 : i32
    %1 = arith.extui %0 : i1 to i32
    %c0_i32_0 = arith.constant 0 : i32
    %2 = arith.cmpi ne, %1, %c0_i32_0 : i32
    scf.if %2 {
      %cst_45 = arith.constant 0.000000e+00 : f32
      %53 = vector.broadcast %cst_45 : f32 to vector<4x12x128xf32>
      %c0_46 = arith.constant 0 : index
      %c0_47 = arith.constant 0 : index
      %c0_48 = arith.constant 0 : index
      %c0_49 = arith.constant 0 : index
      %54 = vector.load %arg5[%c0_46, %c0_47, %c0_48, %c0_49] : memref<1x4x12x128xf32, #tpu.memory_space<vmem>>, vector<1x4x12x128xf32>
      %55 = vector.shape_cast %54 : vector<1x4x12x128xf32> to vector<4x12x128xf32>
      %56 = vector.shape_cast %53 : vector<4x12x128xf32> to vector<1x4x12x128xf32>
      tpu.vector_store %arg5[%c0_46, %c0_47, %c0_48, %c0_49], %56 {strides = array<i32>} : memref<1x4x12x128xf32, #tpu.memory_space<vmem>>, vector<1x4x12x128xf32>,
    } else {
    }
    %c0 = arith.constant 0 : index
    %c0_1 = arith.constant 0 : index
    %3 = vector.load %arg2[%c0, %c0_1] : memref<12x128xf32, #tpu.memory_space<vmem>>, vector<12x128xf32>
    %c0_2 = arith.constant 0 : index
    %c0_3 = arith.constant 0 : index
    %4 = vector.load %arg3[%c0_2, %c0_3] : memref<12x128xf32, #tpu.memory_space<vmem>>, vector<12x128xf32>
    %5 = arith.subf %3, %4 : vector<12x128xf32>
    %6 = arith.mulf %5, %5 : vector<12x128xf32>
    %c0_4 = arith.constant 0 : index
    %c0_5 = arith.constant 0 : index
    %7 = vector.load %arg4[%c0_4, %c0_5] : memref<12x128xf32, #tpu.memory_space<vmem>>, vector<12x128xf32>
    %8 = arith.mulf %7, %6 : vector<12x128xf32>
    %cst = arith.constant 0.000000e+00 : f32
    %9 = vector.broadcast %cst : f32 to vector<12x128xf32>
    %10 = arith.cmpf ogt, %7, %9 : vector<12x128xf32>
    %c0_6 = arith.constant 0 : index
    %c0_7 = arith.constant 0 : index
    %c0_8 = arith.constant 0 : index
    %c0_9 = arith.constant 0 : index
    %11 = vector.load %arg5[%c0_6, %c0_7, %c0_8, %c0_9] : memref<1x4x12x128xf32, #tpu.memory_space<vmem>>, vector<1x1x12x128xf32>
    %12 = vector.shape_cast %11 : vector<1x1x12x128xf32> to vector<12x128xf32>
    %cst_10 = arith.constant 0.000000e+00 : f32
    %13 = vector.broadcast %cst_10 : f32 to vector<12x128xf32>
    %14 = arith.select %10, %8, %13 : vector<12x128xi1>, vector<12x128xf32>
    %15 = vector.shape_cast %14 : vector<12x128xf32> to vector<1x12x128xf32>
    %cst_11 = arith.constant dense<0.000000e+00> : vector<12x128xf32>
    %16 = vector.multi_reduction <add>, %15, %cst_11 [0] : vector<1x12x128xf32> to vector<12x128xf32>
    %17 = arith.addf %12, %16 : vector<12x128xf32>
    %c0_12 = arith.constant 0 : index
    %c0_13 = arith.constant 0 : index
    %c0_14 = arith.constant 0 : index
    %c0_15 = arith.constant 0 : index
    %18 = vector.load %arg5[%c0_12, %c0_13, %c0_14, %c0_15] : memref<1x4x12x128xf32, #tpu.memory_space<vmem>>, vector<1x1x12x128xf32>
    %19 = vector.shape_cast %18 : vector<1x1x12x128xf32> to vector<12x128xf32>
    %20 = vector.shape_cast %17 : vector<12x128xf32> to vector<1x1x12x128xf32>
    tpu.vector_store %arg5[%c0_12, %c0_13, %c0_14, %c0_15], %20 {strides = array<i32>} : memref<1x4x12x128xf32, #tpu.memory_space<vmem>>, vector<1x1x12x128xf32>,
    %c0_16 = arith.constant 0 : index
    %c1 = arith.constant 1 : index
    %c0_17 = arith.constant 0 : index
    %c0_18 = arith.constant 0 : index
    %21 = vector.load %arg5[%c0_16, %c1, %c0_17, %c0_18] : memref<1x4x12x128xf32, #tpu.memory_space<vmem>>, vector<1x1x12x128xf32>
    %22 = vector.shape_cast %21 : vector<1x1x12x128xf32> to vector<12x128xf32>
    %cst_19 = arith.constant 1.000000e+00 : f32
    %cst_20 = arith.constant 0.000000e+00 : f32
    %23 = vector.broadcast %cst_19 : f32 to vector<12x128xf32>
    %24 = vector.broadcast %cst_20 : f32 to vector<12x128xf32>
    %25 = arith.select %10, %23, %24 : vector<12x128xi1>, vector<12x128xf32>
    %26 = vector.shape_cast %25 : vector<12x128xf32> to vector<1x12x128xf32>
    %cst_21 = arith.constant dense<0.000000e+00> : vector<12x128xf32>
    %27 = vector.multi_reduction <add>, %26, %cst_21 [0] : vector<1x12x128xf32> to vector<12x128xf32>
    %28 = arith.addf %22, %27 : vector<12x128xf32>
    %c0_22 = arith.constant 0 : index
    %c1_23 = arith.constant 1 : index
    %c0_24 = arith.constant 0 : index
    %c0_25 = arith.constant 0 : index
    %29 = vector.load %arg5[%c0_22, %c1_23, %c0_24, %c0_25] : memref<1x4x12x128xf32, #tpu.memory_space<vmem>>, vector<1x1x12x128xf32>
    %30 = vector.shape_cast %29 : vector<1x1x12x128xf32> to vector<12x128xf32>
    %31 = vector.shape_cast %28 : vector<12x128xf32> to vector<1x1x12x128xf32>
    tpu.vector_store %arg5[%c0_22, %c1_23, %c0_24, %c0_25], %31 {strides = array<i32>} : memref<1x4x12x128xf32, #tpu.memory_space<vmem>>, vector<1x1x12x128xf32>,
    %c0_26 = arith.constant 0 : index
    %c2 = arith.constant 2 : index
    %c0_27 = arith.constant 0 : index
    %c0_28 = arith.constant 0 : index
    %32 = vector.load %arg5[%c0_26, %c2, %c0_27, %c0_28] : memref<1x4x12x128xf32, #tpu.memory_space<vmem>>, vector<1x1x12x128xf32>
    %33 = vector.shape_cast %32 : vector<1x1x12x128xf32> to vector<12x128xf32>
    %34 = vector.shape_cast %8 : vector<12x128xf32> to vector<1x12x128xf32>
    %cst_29 = arith.constant dense<0.000000e+00> : vector<12x128xf32>
    %35 = vector.multi_reduction <add>, %34, %cst_29 [0] : vector<1x12x128xf32> to vector<12x128xf32>
    %36 = arith.addf %33, %35 : vector<12x128xf32>
    %c0_30 = arith.constant 0 : index
    %c2_31 = arith.constant 2 : index
    %c0_32 = arith.constant 0 : index
    %c0_33 = arith.constant 0 : index
    %37 = vector.load %arg5[%c0_30, %c2_31, %c0_32, %c0_33] : memref<1x4x12x128xf32, #tpu.memory_space<vmem>>, vector<1x1x12x128xf32>
    %38 = vector.shape_cast %37 : vector<1x1x12x128xf32> to vector<12x128xf32>
    %39 = vector.shape_cast %36 : vector<12x128xf32> to vector<1x1x12x128xf32>
    tpu.vector_store %arg5[%c0_30, %c2_31, %c0_32, %c0_33], %39 {strides = array<i32>} : memref<1x4x12x128xf32, #tpu.memory_space<vmem>>, vector<1x1x12x128xf32>,
    %c0_34 = arith.constant 0 : index
    %c3 = arith.constant 3 : index
    %c0_35 = arith.constant 0 : index
    %c0_36 = arith.constant 0 : index
    %40 = vector.load %arg5[%c0_34, %c3, %c0_35, %c0_36] : memref<1x4x12x128xf32, #tpu.memory_space<vmem>>, vector<1x1x12x128xf32>
    %41 = vector.shape_cast %40 : vector<1x1x12x128xf32> to vector<12x128xf32>
    %cst_37 = arith.constant 0.000000e+00 : f32
    %42 = vector.broadcast %cst_37 : f32 to vector<12x128xf32>
    %43 = arith.cmpf one, %8, %42 : vector<12x128xf32>
    %cst_38 = arith.constant 1.000000e+00 : f32
    %cst_39 = arith.constant 0.000000e+00 : f32
    %44 = vector.broadcast %cst_38 : f32 to vector<12x128xf32>
    %45 = vector.broadcast %cst_39 : f32 to vector<12x128xf32>
    %46 = arith.select %43, %44, %45 : vector<12x128xi1>, vector<12x128xf32>
    %47 = vector.shape_cast %46 : vector<12x128xf32> to vector<1x12x128xf32>
    %cst_40 = arith.constant dense<0.000000e+00> : vector<12x128xf32>
    %48 = vector.multi_reduction <add>, %47, %cst_40 [0] : vector<1x12x128xf32> to vector<12x128xf32>
    %49 = arith.addf %41, %48 : vector<12x128xf32>
    %c0_41 = arith.constant 0 : index
    %c3_42 = arith.constant 3 : index
    %c0_43 = arith.constant 0 : index
    %c0_44 = arith.constant 0 : index
    %50 = vector.load %arg5[%c0_41, %c3_42, %c0_43, %c0_44] : memref<1x4x12x128xf32, #tpu.memory_space<vmem>>, vector<1x1x12x128xf32>
    %51 = vector.shape_cast %50 : vector<1x1x12x128xf32> to vector<12x128xf32>
    %52 = vector.shape_cast %49 : vector<12x128xf32> to vector<1x1x12x128xf32>
    tpu.vector_store %arg5[%c0_41, %c3_42, %c0_43, %c0_44], %52 {strides = array<i32>} : memref<1x4x12x128xf32, #tpu.memory_space<vmem>>, vector<1x1x12x128xf32>,
    return
  }
  func.func @transform_0(%arg0: i32, %arg1: i32) -> (i32, i32) {
    %c1_i32 = arith.constant 1 : i32
    %0 = arith.muli %arg0, %c1_i32 : i32
    %1 = arith.addi %0, %arg1 : i32
    %c0_i32 = arith.constant 0 : i32
    %2 = arith.minsi %1, %c0_i32 : i32
    %c0_i32_0 = arith.constant 0 : i32
    %c0_i32_1 = arith.constant 0 : i32
    return %2, %c0_i32_0 : i32, i32
  }
  func.func @transform_1(%arg0: i32, %arg1: i32) -> (i32, i32) {
    %c1_i32 = arith.constant 1 : i32
    %0 = arith.muli %arg0, %c1_i32 : i32
    %1 = arith.addi %0, %arg1 : i32
    %c0_i32 = arith.constant 0 : i32
    %2 = arith.minsi %1, %c0_i32 : i32
    %c0_i32_0 = arith.constant 0 : i32
    %c0_i32_1 = arith.constant 0 : i32
    return %2, %c0_i32_0 : i32, i32
  }
  func.func @transform_2(%arg0: i32, %arg1: i32) -> (i32, i32) {
    %c1_i32 = arith.constant 1 : i32
    %0 = arith.muli %arg0, %c1_i32 : i32
    %1 = arith.addi %0, %arg1 : i32
    %c0_i32 = arith.constant 0 : i32
    %2 = arith.minsi %1, %c0_i32 : i32
    %c0_i32_0 = arith.constant 0 : i32
    %c0_i32_1 = arith.constant 0 : i32
    return %2, %c0_i32_0 : i32, i32
  }
  func.func @transform_3(%arg0: i32, %arg1: i32) -> (i32, i32, i32, i32) {
    %c0_i32 = arith.constant 0 : i32
    %c0_i32_0 = arith.constant 0 : i32
    %c0_i32_1 = arith.constant 0 : i32
    %c0_i32_2 = arith.constant 0 : i32
    return %arg0, %c0_i32, %c0_i32_0, %c0_i32_1 : i32, i32, i32, i32
  }
}

module attributes {stable_mosaic.version = 11 : i64} {
  func.func @kernel(%arg0: i32, %arg1: i32, %arg2: memref<24x128xf32, #tpu.memory_space<vmem>>, %arg3: memref<24x128xf32, #tpu.memory_space<vmem>>, %arg4: memref<24x128xf32, #tpu.memory_space<vmem>>, %arg5: memref<1x4x8x128xf32, #tpu.memory_space<vmem>>) attributes {dimension_semantics = [#tpu.dimension_semantics<arbitrary>, #tpu.dimension_semantics<arbitrary>], iteration_bounds = array<i64: 1, 1>, scalar_prefetch = 0 : i64, scratch_operands = 0 : i64, tpu.core_type = #tpu.core_type<tc>, window_params = [{transform_indices = @transform_0, window_bounds = array<i64: 24, 128>}, {transform_indices = @transform_1, window_bounds = array<i64: 24, 128>}, {transform_indices = @transform_2, window_bounds = array<i64: 24, 128>}, {transform_indices = @transform_3, window_bounds = array<i64: 1, 4, 8, 128>}]} {
    %c0_i32 = arith.constant 0 : i32
    %0 = arith.cmpi eq, %arg1, %c0_i32 : i32
    %1 = arith.extui %0 : i1 to i32
    %c0_i32_0 = arith.constant 0 : i32
    %2 = arith.cmpi ne, %1, %c0_i32_0 : i32
    scf.if %2 {
      %cst_45 = arith.constant 0.000000e+00 : f32
      %53 = vector.broadcast %cst_45 : f32 to vector<4x8x128xf32>
      %c0_46 = arith.constant 0 : index
      %c0_47 = arith.constant 0 : index
      %c0_48 = arith.constant 0 : index
      %c0_49 = arith.constant 0 : index
      %54 = vector.load %arg5[%c0_46, %c0_47, %c0_48, %c0_49] : memref<1x4x8x128xf32, #tpu.memory_space<vmem>>, vector<1x4x8x128xf32>
      %55 = vector.shape_cast %54 : vector<1x4x8x128xf32> to vector<4x8x128xf32>
      %56 = vector.shape_cast %53 : vector<4x8x128xf32> to vector<1x4x8x128xf32>
      tpu.vector_store %arg5[%c0_46, %c0_47, %c0_48, %c0_49], %56 {strides = array<i32>} : memref<1x4x8x128xf32, #tpu.memory_space<vmem>>, vector<1x4x8x128xf32>,
    } else {
    }
    %c0 = arith.constant 0 : index
    %c0_1 = arith.constant 0 : index
    %3 = vector.load %arg2[%c0, %c0_1] : memref<24x128xf32, #tpu.memory_space<vmem>>, vector<24x128xf32>
    %c0_2 = arith.constant 0 : index
    %c0_3 = arith.constant 0 : index
    %4 = vector.load %arg3[%c0_2, %c0_3] : memref<24x128xf32, #tpu.memory_space<vmem>>, vector<24x128xf32>
    %5 = arith.subf %3, %4 : vector<24x128xf32>
    %6 = arith.mulf %5, %5 : vector<24x128xf32>
    %c0_4 = arith.constant 0 : index
    %c0_5 = arith.constant 0 : index
    %7 = vector.load %arg4[%c0_4, %c0_5] : memref<24x128xf32, #tpu.memory_space<vmem>>, vector<24x128xf32>
    %8 = arith.mulf %7, %6 : vector<24x128xf32>
    %cst = arith.constant 0.000000e+00 : f32
    %9 = vector.broadcast %cst : f32 to vector<24x128xf32>
    %10 = arith.cmpf ogt, %7, %9 : vector<24x128xf32>
    %c0_6 = arith.constant 0 : index
    %c0_7 = arith.constant 0 : index
    %c0_8 = arith.constant 0 : index
    %c0_9 = arith.constant 0 : index
    %11 = vector.load %arg5[%c0_6, %c0_7, %c0_8, %c0_9] : memref<1x4x8x128xf32, #tpu.memory_space<vmem>>, vector<1x1x8x128xf32>
    %12 = vector.shape_cast %11 : vector<1x1x8x128xf32> to vector<8x128xf32>
    %cst_10 = arith.constant 0.000000e+00 : f32
    %13 = vector.broadcast %cst_10 : f32 to vector<24x128xf32>
    %14 = arith.select %10, %8, %13 : vector<24x128xi1>, vector<24x128xf32>
    %15 = vector.shape_cast %14 : vector<24x128xf32> to vector<3x8x128xf32>
    %cst_11 = arith.constant dense<0.000000e+00> : vector<8x128xf32>
    %16 = vector.multi_reduction <add>, %15, %cst_11 [0] : vector<3x8x128xf32> to vector<8x128xf32>
    %17 = arith.addf %12, %16 : vector<8x128xf32>
    %c0_12 = arith.constant 0 : index
    %c0_13 = arith.constant 0 : index
    %c0_14 = arith.constant 0 : index
    %c0_15 = arith.constant 0 : index
    %18 = vector.load %arg5[%c0_12, %c0_13, %c0_14, %c0_15] : memref<1x4x8x128xf32, #tpu.memory_space<vmem>>, vector<1x1x8x128xf32>
    %19 = vector.shape_cast %18 : vector<1x1x8x128xf32> to vector<8x128xf32>
    %20 = vector.shape_cast %17 : vector<8x128xf32> to vector<1x1x8x128xf32>
    tpu.vector_store %arg5[%c0_12, %c0_13, %c0_14, %c0_15], %20 {strides = array<i32>} : memref<1x4x8x128xf32, #tpu.memory_space<vmem>>, vector<1x1x8x128xf32>,
    %c0_16 = arith.constant 0 : index
    %c1 = arith.constant 1 : index
    %c0_17 = arith.constant 0 : index
    %c0_18 = arith.constant 0 : index
    %21 = vector.load %arg5[%c0_16, %c1, %c0_17, %c0_18] : memref<1x4x8x128xf32, #tpu.memory_space<vmem>>, vector<1x1x8x128xf32>
    %22 = vector.shape_cast %21 : vector<1x1x8x128xf32> to vector<8x128xf32>
    %cst_19 = arith.constant 1.000000e+00 : f32
    %cst_20 = arith.constant 0.000000e+00 : f32
    %23 = vector.broadcast %cst_19 : f32 to vector<24x128xf32>
    %24 = vector.broadcast %cst_20 : f32 to vector<24x128xf32>
    %25 = arith.select %10, %23, %24 : vector<24x128xi1>, vector<24x128xf32>
    %26 = vector.shape_cast %25 : vector<24x128xf32> to vector<3x8x128xf32>
    %cst_21 = arith.constant dense<0.000000e+00> : vector<8x128xf32>
    %27 = vector.multi_reduction <add>, %26, %cst_21 [0] : vector<3x8x128xf32> to vector<8x128xf32>
    %28 = arith.addf %22, %27 : vector<8x128xf32>
    %c0_22 = arith.constant 0 : index
    %c1_23 = arith.constant 1 : index
    %c0_24 = arith.constant 0 : index
    %c0_25 = arith.constant 0 : index
    %29 = vector.load %arg5[%c0_22, %c1_23, %c0_24, %c0_25] : memref<1x4x8x128xf32, #tpu.memory_space<vmem>>, vector<1x1x8x128xf32>
    %30 = vector.shape_cast %29 : vector<1x1x8x128xf32> to vector<8x128xf32>
    %31 = vector.shape_cast %28 : vector<8x128xf32> to vector<1x1x8x128xf32>
    tpu.vector_store %arg5[%c0_22, %c1_23, %c0_24, %c0_25], %31 {strides = array<i32>} : memref<1x4x8x128xf32, #tpu.memory_space<vmem>>, vector<1x1x8x128xf32>,
    %c0_26 = arith.constant 0 : index
    %c2 = arith.constant 2 : index
    %c0_27 = arith.constant 0 : index
    %c0_28 = arith.constant 0 : index
    %32 = vector.load %arg5[%c0_26, %c2, %c0_27, %c0_28] : memref<1x4x8x128xf32, #tpu.memory_space<vmem>>, vector<1x1x8x128xf32>
    %33 = vector.shape_cast %32 : vector<1x1x8x128xf32> to vector<8x128xf32>
    %34 = vector.shape_cast %8 : vector<24x128xf32> to vector<3x8x128xf32>
    %cst_29 = arith.constant dense<0.000000e+00> : vector<8x128xf32>
    %35 = vector.multi_reduction <add>, %34, %cst_29 [0] : vector<3x8x128xf32> to vector<8x128xf32>
    %36 = arith.addf %33, %35 : vector<8x128xf32>
    %c0_30 = arith.constant 0 : index
    %c2_31 = arith.constant 2 : index
    %c0_32 = arith.constant 0 : index
    %c0_33 = arith.constant 0 : index
    %37 = vector.load %arg5[%c0_30, %c2_31, %c0_32, %c0_33] : memref<1x4x8x128xf32, #tpu.memory_space<vmem>>, vector<1x1x8x128xf32>
    %38 = vector.shape_cast %37 : vector<1x1x8x128xf32> to vector<8x128xf32>
    %39 = vector.shape_cast %36 : vector<8x128xf32> to vector<1x1x8x128xf32>
    tpu.vector_store %arg5[%c0_30, %c2_31, %c0_32, %c0_33], %39 {strides = array<i32>} : memref<1x4x8x128xf32, #tpu.memory_space<vmem>>, vector<1x1x8x128xf32>,
    %c0_34 = arith.constant 0 : index
    %c3 = arith.constant 3 : index
    %c0_35 = arith.constant 0 : index
    %c0_36 = arith.constant 0 : index
    %40 = vector.load %arg5[%c0_34, %c3, %c0_35, %c0_36] : memref<1x4x8x128xf32, #tpu.memory_space<vmem>>, vector<1x1x8x128xf32>
    %41 = vector.shape_cast %40 : vector<1x1x8x128xf32> to vector<8x128xf32>
    %cst_37 = arith.constant 0.000000e+00 : f32
    %42 = vector.broadcast %cst_37 : f32 to vector<24x128xf32>
    %43 = arith.cmpf one, %8, %42 : vector<24x128xf32>
    %cst_38 = arith.constant 1.000000e+00 : f32
    %cst_39 = arith.constant 0.000000e+00 : f32
    %44 = vector.broadcast %cst_38 : f32 to vector<24x128xf32>
    %45 = vector.broadcast %cst_39 : f32 to vector<24x128xf32>
    %46 = arith.select %43, %44, %45 : vector<24x128xi1>, vector<24x128xf32>
    %47 = vector.shape_cast %46 : vector<24x128xf32> to vector<3x8x128xf32>
    %cst_40 = arith.constant dense<0.000000e+00> : vector<8x128xf32>
    %48 = vector.multi_reduction <add>, %47, %cst_40 [0] : vector<3x8x128xf32> to vector<8x128xf32>
    %49 = arith.addf %41, %48 : vector<8x128xf32>
    %c0_41 = arith.constant 0 : index
    %c3_42 = arith.constant 3 : index
    %c0_43 = arith.constant 0 : index
    %c0_44 = arith.constant 0 : index
    %50 = vector.load %arg5[%c0_41, %c3_42, %c0_43, %c0_44] : memref<1x4x8x128xf32, #tpu.memory_space<vmem>>, vector<1x1x8x128xf32>
    %51 = vector.shape_cast %50 : vector<1x1x8x128xf32> to vector<8x128xf32>
    %52 = vector.shape_cast %49 : vector<8x128xf32> to vector<1x1x8x128xf32>
    tpu.vector_store %arg5[%c0_41, %c3_42, %c0_43, %c0_44], %52 {strides = array<i32>} : memref<1x4x8x128xf32, #tpu.memory_space<vmem>>, vector<1x1x8x128xf32>,
    return
  }
  func.func @transform_0(%arg0: i32, %arg1: i32) -> (i32, i32) {
    %c1_i32 = arith.constant 1 : i32
    %0 = arith.muli %arg0, %c1_i32 : i32
    %1 = arith.addi %0, %arg1 : i32
    %c0_i32 = arith.constant 0 : i32
    %2 = arith.minsi %1, %c0_i32 : i32
    %c0_i32_0 = arith.constant 0 : i32
    %c0_i32_1 = arith.constant 0 : i32
    return %2, %c0_i32_0 : i32, i32
  }
  func.func @transform_1(%arg0: i32, %arg1: i32) -> (i32, i32) {
    %c1_i32 = arith.constant 1 : i32
    %0 = arith.muli %arg0, %c1_i32 : i32
    %1 = arith.addi %0, %arg1 : i32
    %c0_i32 = arith.constant 0 : i32
    %2 = arith.minsi %1, %c0_i32 : i32
    %c0_i32_0 = arith.constant 0 : i32
    %c0_i32_1 = arith.constant 0 : i32
    return %2, %c0_i32_0 : i32, i32
  }
  func.func @transform_2(%arg0: i32, %arg1: i32) -> (i32, i32) {
    %c1_i32 = arith.constant 1 : i32
    %0 = arith.muli %arg0, %c1_i32 : i32
    %1 = arith.addi %0, %arg1 : i32
    %c0_i32 = arith.constant 0 : i32
    %2 = arith.minsi %1, %c0_i32 : i32
    %c0_i32_0 = arith.constant 0 : i32
    %c0_i32_1 = arith.constant 0 : i32
    return %2, %c0_i32_0 : i32, i32
  }
  func.func @transform_3(%arg0: i32, %arg1: i32) -> (i32, i32, i32, i32) {
    %c0_i32 = arith.constant 0 : i32
    %c0_i32_0 = arith.constant 0 : i32
    %c0_i32_1 = arith.constant 0 : i32
    %c0_i32_2 = arith.constant 0 : i32
    return %arg0, %c0_i32, %c0_i32_0, %c0_i32_1 : i32, i32, i32, i32
  }
}

module attributes {stable_mosaic.version = 11 : i64} {
  func.func @kernel(%arg0: i32, %arg1: i32, %arg2: memref<2x256xf32, #tpu.memory_space<vmem>>, %arg3: memref<2x256xf32, #tpu.memory_space<vmem>>, %arg4: memref<1x256xf32, #tpu.memory_space<vmem>>, %arg5: memref<2x2x128xf32, #tpu.memory_space<vmem>>) attributes {dimension_semantics = [#tpu.dimension_semantics<arbitrary>, #tpu.dimension_semantics<arbitrary>], iteration_bounds = array<i64: 1, 1>, scalar_prefetch = 0 : i64, scratch_operands = 0 : i64, tpu.core_type = #tpu.core_type<tc>, window_params = [{transform_indices = @transform_0, window_bounds = array<i64: 2, 256>}, {transform_indices = @transform_1, window_bounds = array<i64: 2, 256>}, {transform_indices = @transform_2, window_bounds = array<i64: 1, 256>}, {transform_indices = @transform_3, window_bounds = array<i64: 2, 2, 128>}]} {
    %c0_i32 = arith.constant 0 : i32
    %0 = arith.cmpi eq, %arg1, %c0_i32 : i32
    %1 = arith.extui %0 : i1 to i32
    %c0_i32_0 = arith.constant 0 : i32
    %2 = arith.cmpi ne, %1, %c0_i32_0 : i32
    scf.if %2 {
      %cst = arith.constant 0.000000e+00 : f32
      %28 = vector.broadcast %cst : f32 to vector<2x2x128xf32>
      %c0_17 = arith.constant 0 : index
      %c0_18 = arith.constant 0 : index
      %c0_19 = arith.constant 0 : index
      %29 = vector.load %arg5[%c0_17, %c0_18, %c0_19] : memref<2x2x128xf32, #tpu.memory_space<vmem>>, vector<2x2x128xf32>
      tpu.vector_store %arg5[%c0_17, %c0_18, %c0_19], %28 {strides = array<i32>} : memref<2x2x128xf32, #tpu.memory_space<vmem>>, vector<2x2x128xf32>,
    } else {
    }
    %c0 = arith.constant 0 : index
    %c0_1 = arith.constant 0 : index
    %3 = vector.load %arg4[%c0, %c0_1] : memref<1x256xf32, #tpu.memory_space<vmem>>, vector<1x256xf32>
    %c0_2 = arith.constant 0 : index
    %c0_3 = arith.constant 0 : index
    %4 = vector.load %arg2[%c0_2, %c0_3] : memref<2x256xf32, #tpu.memory_space<vmem>>, vector<2x256xf32>
    %5 = vector.broadcast %3 : vector<1x256xf32> to vector<2x256xf32>
    %6 = arith.mulf %4, %5 : vector<2x256xf32>
    %c0_4 = arith.constant 0 : index
    %c0_5 = arith.constant 0 : index
    %7 = vector.load %arg3[%c0_4, %c0_5] : memref<2x256xf32, #tpu.memory_space<vmem>>, vector<2x256xf32>
    %8 = vector.broadcast %3 : vector<1x256xf32> to vector<2x256xf32>
    %9 = arith.mulf %7, %8 : vector<2x256xf32>
    %10 = vector.extract_strided_slice %6 {offsets = [0, 0], sizes = [2, 128], strides = [1, 1]} : vector<2x256xf32> to vector<2x128xf32>
    %11 = vector.extract_strided_slice %9 {offsets = [0, 0], sizes = [2, 128], strides = [1, 1]} : vector<2x256xf32> to vector<2x128xf32>
    %12 = vector.extract_strided_slice %6 {offsets = [0, 128], sizes = [2, 128], strides = [1, 1]} : vector<2x256xf32> to vector<2x128xf32>
    %13 = arith.addf %10, %12 : vector<2x128xf32>
    %14 = vector.extract_strided_slice %9 {offsets = [0, 128], sizes = [2, 128], strides = [1, 1]} : vector<2x256xf32> to vector<2x128xf32>
    %15 = arith.addf %11, %14 : vector<2x128xf32>
    %c0_6 = arith.constant 0 : index
    %c0_7 = arith.constant 0 : index
    %c0_8 = arith.constant 0 : index
    %16 = vector.load %arg5[%c0_6, %c0_7, %c0_8] : memref<2x2x128xf32, #tpu.memory_space<vmem>>, vector<1x2x128xf32>
    %17 = vector.shape_cast %16 : vector<1x2x128xf32> to vector<2x128xf32>
    %18 = arith.addf %17, %13 : vector<2x128xf32>
    %c0_9 = arith.constant 0 : index
    %c0_10 = arith.constant 0 : index
    %c0_11 = arith.constant 0 : index
    %19 = vector.load %arg5[%c0_9, %c0_10, %c0_11] : memref<2x2x128xf32, #tpu.memory_space<vmem>>, vector<1x2x128xf32>
    %20 = vector.shape_cast %19 : vector<1x2x128xf32> to vector<2x128xf32>
    %21 = vector.shape_cast %18 : vector<2x128xf32> to vector<1x2x128xf32>
    tpu.vector_store %arg5[%c0_9, %c0_10, %c0_11], %21 {strides = array<i32>} : memref<2x2x128xf32, #tpu.memory_space<vmem>>, vector<1x2x128xf32>,
    %c1 = arith.constant 1 : index
    %c0_12 = arith.constant 0 : index
    %c0_13 = arith.constant 0 : index
    %22 = vector.load %arg5[%c1, %c0_12, %c0_13] : memref<2x2x128xf32, #tpu.memory_space<vmem>>, vector<1x2x128xf32>
    %23 = vector.shape_cast %22 : vector<1x2x128xf32> to vector<2x128xf32>
    %24 = arith.addf %23, %15 : vector<2x128xf32>
    %c1_14 = arith.constant 1 : index
    %c0_15 = arith.constant 0 : index
    %c0_16 = arith.constant 0 : index
    %25 = vector.load %arg5[%c1_14, %c0_15, %c0_16] : memref<2x2x128xf32, #tpu.memory_space<vmem>>, vector<1x2x128xf32>
    %26 = vector.shape_cast %25 : vector<1x2x128xf32> to vector<2x128xf32>
    %27 = vector.shape_cast %24 : vector<2x128xf32> to vector<1x2x128xf32>
    tpu.vector_store %arg5[%c1_14, %c0_15, %c0_16], %27 {strides = array<i32>} : memref<2x2x128xf32, #tpu.memory_space<vmem>>, vector<1x2x128xf32>,
    return
  }
  func.func @transform_0(%arg0: i32, %arg1: i32) -> (i32, i32) {
    %c0_i32 = arith.constant 0 : i32
    return %arg0, %arg1 : i32, i32
  }
  func.func @transform_1(%arg0: i32, %arg1: i32) -> (i32, i32) {
    %c0_i32 = arith.constant 0 : i32
    return %arg0, %arg1 : i32, i32
  }
  func.func @transform_2(%arg0: i32, %arg1: i32) -> (i32, i32) {
    %c0_i32 = arith.constant 0 : i32
    %c0_i32_0 = arith.constant 0 : i32
    return %c0_i32, %arg1 : i32, i32
  }
  func.func @transform_3(%arg0: i32, %arg1: i32) -> (i32, i32, i32) {
    %c0_i32 = arith.constant 0 : i32
    %c0_i32_0 = arith.constant 0 : i32
    %c0_i32_1 = arith.constant 0 : i32
    return %c0_i32, %arg0, %c0_i32_0 : i32, i32, i32
  }
}

</mosaic_0001>

<llo_original>
// kernel: _lambda_.3
$region0: #{_lambda_.3}
  #allocation0 [shape = 'u32[]', space=smem, size = 0x4, offset = 0x4, fixed_abs, tag = 'smem constant byte address 0x4 - core index']
  #allocation1 [shape = 'u32[144,128]{1,0:T(1,128)}', space=vmem, size = 0x12000, scoped, tag = 'internal scratch']
  %s0 = inlined_call_operand.vmem [shape: f32[24,128], index: 0, kind: input, shape index: {}]
  %s1 = inlined_call_operand.vmem [shape: f32[24,128], index: 1, kind: input, shape index: {}]
  %s2 = inlined_call_operand.vmem [shape: f32[24,128], index: 2, kind: input, shape index: {}]
  %s3 = inlined_call_operand.vmem [shape: f32[1,4,8,128], index: 3, kind: output, shape index: {}]
  %s4 = sld [smem:[#allocation0]]
  $region26: #{_lambda_.3} parent=0
    _
  %s6 = ssub.s32 1, %s4
  %s7 = scalar_select 0, %s6, %s4
  // Predicated region
  $region2: #{_lambda_.3} parent=0 // pred_check
    _
  $region3: #{_lambda_.3} parent=0 // pred_check_branch
    %9 = sbr.rel (0) target = $region5
  $region4: #{_lambda_.3} parent=0 // pred_region
    %s10 = sadd.s32 0, 0
    %p11 = scmp.lt.s32.totalorder %s10, 0
    %s12 = scalar_select %p11, %s10, 0
    %s13 = smul.u32 3, %s12
    %p14 = scmp.lt.s32.totalorder %s13, 2
    %s15 = scalar_select %p14, %s13, 2
    %s16 = smul.addr %s15, 8
    %s17 = scalar_lea.vmem %s0, %s16
    %s18 = sadd.s32 0, 0
    %p19 = scmp.lt.s32.totalorder %s18, 0
    %s20 = scalar_select %p19, %s18, 0
    %s21 = smul.u32 3, %s20
  $region5: #{_lambda_.3} parent=0 // pred_fallthru
    _
  // Predicated region
  $region6: #{_lambda_.3} parent=0 // pred_check
    _
  $region7: #{_lambda_.3} parent=0 // pred_check_branch
    %23 = sbr.rel (0) target = $region9
  $region8: #{_lambda_.3} parent=0 // pred_region
    %s24 = sadd.s32 0, 0
    %p25 = scmp.lt.s32.totalorder %s24, 0
    %s26 = scalar_select %p25, %s24, 0
    %s27 = smul.u32 3, %s26
    %p28 = scmp.lt.s32.totalorder %s27, 2
    %s29 = scalar_select %p28, %s27, 2
    %s30 = smul.addr %s29, 8
    %s31 = scalar_lea.vmem %s1, %s30
    %s32 = sadd.s32 0, 0
    %p33 = scmp.lt.s32.totalorder %s32, 0
    %s34 = scalar_select %p33, %s32, 0
    %s35 = smul.u32 3, %s34
  $region9: #{_lambda_.3} parent=0 // pred_fallthru
    _
  // Predicated region
  $region10: #{_lambda_.3} parent=0 // pred_check
    _
  $region11: #{_lambda_.3} parent=0 // pred_check_branch
    %37 = sbr.rel (0) target = $region13
  $region12: #{_lambda_.3} parent=0 // pred_region
    %s38 = sadd.s32 0, 0
    %p39 = scmp.lt.s32.totalorder %s38, 0
    %s40 = scalar_select %p39, %s38, 0
    %s41 = smul.u32 3, %s40
    %p42 = scmp.lt.s32.totalorder %s41, 2
    %s43 = scalar_select %p42, %s41, 2
    %s44 = smul.addr %s43, 8
    %s45 = scalar_lea.vmem %s2, %s44
    %s46 = sadd.s32 0, 0
    %p47 = scmp.lt.s32.totalorder %s46, 0
    %s48 = scalar_select %p47, %s46, 0
    %s49 = smul.u32 3, %s48
  $region13: #{_lambda_.3} parent=0 // pred_fallthru
    _
  %s50 = sadd.s32 0, 0
  %p51 = scmp.lt.s32.totalorder %s50, 0
  %s52 = scalar_select %p51, %s50, 0
  %s53 = smul.u32 3, %s52
  %p54 = scmp.lt.s32.totalorder %s53, 2
  %s55 = scalar_select %p54, %s53, 2
  %s56 = smul.addr %s55, 8
  %s57 = scalar_lea.vmem %s0, %s56
  %s58 = sadd.s32 0, 0
  %p59 = scmp.lt.s32.totalorder %s58, 0
  %s60 = scalar_select %p59, %s58, 0
  %s61 = smul.u32 3, %s60
  %p62 = scmp.lt.s32.totalorder %s61, 2
  %s63 = scalar_select %p62, %s61, 2
  %s64 = smul.addr %s63, 8
  %s65 = scalar_lea.vmem %s1, %s64
  %s66 = sadd.s32 0, 0
  %p67 = scmp.lt.s32.totalorder %s66, 0
  %s68 = scalar_select %p67, %s66, 0
  %s69 = smul.u32 3, %s68
  %p70 = scmp.lt.s32.totalorder %s69, 2
  %s71 = scalar_select %p70, %s69, 2
  %s72 = smul.addr %s71, 8
  %s73 = scalar_lea.vmem %s2, %s72
  %s74 = sadd.s32 0, 0
  %p75 = scmp.lt.s32.totalorder %s74, 0
  %s76 = scalar_select %p75, %s74, 0
  %s77 = smul.u32 3, %s76
  %p78 = scmp.lt.s32.totalorder %s77, 2
  %s79 = scalar_select %p78, %s77, 2
  %s80 = smul.addr %s79, 8
  %s81 = scalar_lea.vmem %s0, %s80
  %s82 = sadd.s32 0, 0
  %p83 = scmp.lt.s32.totalorder %s82, 0
  %s84 = scalar_select %p83, %s82, 0
  %s85 = smul.u32 3, %s84
  %s86 = sadd.s32 0, 0
  %p87 = scmp.lt.s32.totalorder %s86, 0
  %s88 = scalar_select %p87, %s86, 0
  %s89 = smul.u32 3, %s88
  %p90 = scmp.lt.s32.totalorder %s89, 2
  %s91 = scalar_select %p90, %s89, 2
  %s92 = smul.addr %s91, 8
  %s93 = scalar_lea.vmem %s1, %s92
  %s94 = sadd.s32 0, 0
  %p95 = scmp.lt.s32.totalorder %s94, 0
  %s96 = scalar_select %p95, %s94, 0
  %s97 = smul.u32 3, %s96
  %s98 = sadd.s32 0, 0
  %p99 = scmp.lt.s32.totalorder %s98, 0
  %s100 = scalar_select %p99, %s98, 0
  %s101 = smul.u32 3, %s100
  %p102 = scmp.lt.s32.totalorder %s101, 2
  %s103 = scalar_select %p102, %s101, 2
  %s104 = smul.addr %s103, 8
  %s105 = scalar_lea.vmem %s2, %s104
  %s106 = sadd.s32 0, 0
  %p107 = scmp.lt.s32.totalorder %s106, 0
  %s108 = scalar_select %p107, %s106, 0
  %s109 = smul.u32 3, %s108
  %p110 = scmp.eq.s32.totalorder 0, 0
  // Predicated region
  $region14: #{_lambda_.3} parent=0 // pred_check
    %p111 = pneg %p110
  $region15: #{_lambda_.3} parent=0 // pred_check_branch
    %113 = sbr.rel (%p111) target = $region17
  $region16: #{_lambda_.3} parent=0 // pred_region
    %114 = vst [vmem:[%s3] sm:$0xff] 0.0
    %115 = vst [vmem:[%s3 + $0x8] sm:$0xff] 0.0
    %116 = vst [vmem:[%s3 + $0x10] sm:$0xff] 0.0
    %117 = vst [vmem:[%s3 + $0x18] sm:$0xff] 0.0
  $region17: #{_lambda_.3} parent=0 // pred_fallthru
    _
  %v118 = vld [vmem:[%s81] sm:$0xff]
  %v119 = vld [vmem:[%s81 + $0x8] sm:$0xff]
  %v120 = vld [vmem:[%s81 + $0x10] sm:$0xff]
  %v121 = vld [vmem:[%s93] sm:$0xff]
  %v122 = vld [vmem:[%s93 + $0x8] sm:$0xff]
  %v123 = vld [vmem:[%s93 + $0x10] sm:$0xff]
  %v124 = vsub.f32 %v118, %v121
  %v125 = vsub.f32 %v119, %v122
  %v126 = vsub.f32 %v120, %v123
  %v127 = vmul.f32 %v124, %v124
  %v128 = vmul.f32 %v125, %v125
  %v129 = vmul.f32 %v126, %v126
  %v130 = vld [vmem:[%s105] sm:$0xff]
  %v131 = vld [vmem:[%s105 + $0x8] sm:$0xff]
  %v132 = vld [vmem:[%s105 + $0x10] sm:$0xff]
  %v133 = vmul.f32 %v130, %v127
  %v134 = vmul.f32 %v131, %v128
  %v135 = vmul.f32 %v132, %v129
  %vm136 = vcmp.gt.f32.partialorder %v130, 0.0
  %vm137 = vcmp.gt.f32.partialorder %v131, 0.0
  %vm138 = vcmp.gt.f32.partialorder %v132, 0.0
  %v139 = vld [vmem:[%s3] sm:$0xff]
  %v140 = vsel %vm136, %v133, 0.0
  %v141 = vsel %vm137, %v134, 0.0
  %v142 = vsel %vm138, %v135, 0.0
  %v143 = vadd.f32 %v140, %v141
  %v144 = vadd.f32 %v143, %v142
  %v145 = vadd.f32 %v139, %v144
  %146 = vst [vmem:[%s3] sm:$0xff] %v145
  %s147 = scalar_lea.vmem %s3, 8
  %v148 = vld [vmem:[%s147] sm:$0xff]
  %v149 = vsel %vm136, 1.0, 0.0
  %v150 = vsel %vm137, 1.0, 0.0
  %v151 = vsel %vm138, 1.0, 0.0
  %v152 = vadd.f32 %v149, %v150
  %v153 = vadd.f32 %v152, %v151
  %v154 = vadd.f32 %v148, %v153
  %155 = vst [vmem:[%s147] sm:$0xff] %v154
  %s156 = scalar_lea.vmem %s3, 16
  %v157 = vld [vmem:[%s156] sm:$0xff]
  %v158 = vadd.f32 %v133, %v134
  %v159 = vadd.f32 %v158, %v135
  %v160 = vadd.f32 %v157, %v159
  %161 = vst [vmem:[%s156] sm:$0xff] %v160
  %s162 = scalar_lea.vmem %s3, 24
  %v163 = vld [vmem:[%s162] sm:$0xff]
  %vm164 = vcmp.ne.f32.partialorder %v133, 0.0
  %vm165 = vcmp.ne.f32.partialorder %v134, 0.0
  %vm166 = vcmp.ne.f32.partialorder %v135, 0.0
  %v167 = vsel %vm164, 1.0, 0.0
  %v168 = vsel %vm165, 1.0, 0.0
  %v169 = vsel %vm166, 1.0, 0.0
  %v170 = vadd.f32 %v167, %v168
  %v171 = vadd.f32 %v170, %v169
  %v172 = vadd.f32 %v163, %v171
  %173 = vst [vmem:[%s162] sm:$0xff] %v172
  // Predicated region
  $region18: #{_lambda_.3} parent=0 // pred_check
    _
  $region19: #{_lambda_.3} parent=0 // pred_check_branch
    %175 = sbr.rel (0) target = $region21
  $region20: #{_lambda_.3} parent=0 // pred_region
    _
  $region21: #{_lambda_.3} parent=0 // pred_fallthru
    _
  // Predicated region
  $region22: #{_lambda_.3} parent=0 // pred_check
    _
  $region23: #{_lambda_.3} parent=0 // pred_check_branch
    %177 = sbr.rel (0) target = $region25
  $region24: #{_lambda_.3} parent=0 // pred_region
    _
  $region25: #{_lambda_.3} parent=0 // pred_fallthru
    _

// kernel: _lambda_.4
$region0: #{_lambda_.4}
  #allocation0 [shape = 'u32[]', space=smem, size = 0x4, offset = 0x4, fixed_abs, tag = 'smem constant byte address 0x4 - core index']
  #allocation1 [shape = 'u32[144,128]{1,0:T(1,128)}', space=vmem, size = 0x12000, scoped, tag = 'internal scratch']
  %s0 = inlined_call_operand.vmem [shape: f32[12,128], index: 0, kind: input, shape index: {}]
  %s1 = inlined_call_operand.vmem [shape: f32[12,128], index: 1, kind: input, shape index: {}]
  %s2 = inlined_call_operand.vmem [shape: f32[12,128], index: 2, kind: input, shape index: {}]
  %s3 = inlined_call_operand.vmem [shape: f32[1,4,12,128], index: 3, kind: output, shape index: {}]
  %s4 = sld [smem:[#allocation0]]
  $region26: #{_lambda_.4} parent=0
    _
  %s6 = ssub.s32 1, %s4
  %s7 = scalar_select 0, %s6, %s4
  // Predicated region
  $region2: #{_lambda_.4} parent=0 // pred_check
    _
  $region3: #{_lambda_.4} parent=0 // pred_check_branch
    %9 = sbr.rel (0) target = $region5
  $region4: #{_lambda_.4} parent=0 // pred_region
    %s10 = sadd.s32 0, 0
    %p11 = scmp.lt.s32.totalorder %s10, 0
    %s12 = scalar_select %p11, %s10, 0
    %s13 = smul.u32 2, %s12
    %p14 = scmp.lt.s32.totalorder %s13, 1
    %s15 = scalar_select %p14, %s13, 1
    %s16 = smul.addr %s15, 8
    %s17 = scalar_lea.vmem %s0, %s16
    %s18 = sadd.s32 0, 0
    %p19 = scmp.lt.s32.totalorder %s18, 0
    %s20 = scalar_select %p19, %s18, 0
    %s21 = smul.u32 2, %s20
  $region5: #{_lambda_.4} parent=0 // pred_fallthru
    _
  // Predicated region
  $region6: #{_lambda_.4} parent=0 // pred_check
    _
  $region7: #{_lambda_.4} parent=0 // pred_check_branch
    %23 = sbr.rel (0) target = $region9
  $region8: #{_lambda_.4} parent=0 // pred_region
    %s24 = sadd.s32 0, 0
    %p25 = scmp.lt.s32.totalorder %s24, 0
    %s26 = scalar_select %p25, %s24, 0
    %s27 = smul.u32 2, %s26
    %p28 = scmp.lt.s32.totalorder %s27, 1
    %s29 = scalar_select %p28, %s27, 1
    %s30 = smul.addr %s29, 8
    %s31 = scalar_lea.vmem %s1, %s30
    %s32 = sadd.s32 0, 0
    %p33 = scmp.lt.s32.totalorder %s32, 0
    %s34 = scalar_select %p33, %s32, 0
    %s35 = smul.u32 2, %s34
  $region9: #{_lambda_.4} parent=0 // pred_fallthru
    _
  // Predicated region
  $region10: #{_lambda_.4} parent=0 // pred_check
    _
  $region11: #{_lambda_.4} parent=0 // pred_check_branch
    %37 = sbr.rel (0) target = $region13
  $region12: #{_lambda_.4} parent=0 // pred_region
    %s38 = sadd.s32 0, 0
    %p39 = scmp.lt.s32.totalorder %s38, 0
    %s40 = scalar_select %p39, %s38, 0
    %s41 = smul.u32 2, %s40
    %p42 = scmp.lt.s32.totalorder %s41, 1
    %s43 = scalar_select %p42, %s41, 1
    %s44 = smul.addr %s43, 8
    %s45 = scalar_lea.vmem %s2, %s44
    %s46 = sadd.s32 0, 0
    %p47 = scmp.lt.s32.totalorder %s46, 0
    %s48 = scalar_select %p47, %s46, 0
    %s49 = smul.u32 2, %s48
  $region13: #{_lambda_.4} parent=0 // pred_fallthru
    _
  %s50 = sadd.s32 0, 0
  %p51 = scmp.lt.s32.totalorder %s50, 0
  %s52 = scalar_select %p51, %s50, 0
  %s53 = smul.u32 2, %s52
  %p54 = scmp.lt.s32.totalorder %s53, 1
  %s55 = scalar_select %p54, %s53, 1
  %s56 = smul.addr %s55, 8
  %s57 = scalar_lea.vmem %s0, %s56
  %s58 = sadd.s32 0, 0
  %p59 = scmp.lt.s32.totalorder %s58, 0
  %s60 = scalar_select %p59, %s58, 0
  %s61 = smul.u32 2, %s60
  %p62 = scmp.lt.s32.totalorder %s61, 1
  %s63 = scalar_select %p62, %s61, 1
  %s64 = smul.addr %s63, 8
  %s65 = scalar_lea.vmem %s1, %s64
  %s66 = sadd.s32 0, 0
  %p67 = scmp.lt.s32.totalorder %s66, 0
  %s68 = scalar_select %p67, %s66, 0
  %s69 = smul.u32 2, %s68
  %p70 = scmp.lt.s32.totalorder %s69, 1
  %s71 = scalar_select %p70, %s69, 1
  %s72 = smul.addr %s71, 8
  %s73 = scalar_lea.vmem %s2, %s72
  %s74 = sadd.s32 0, 0
  %p75 = scmp.lt.s32.totalorder %s74, 0
  %s76 = scalar_select %p75, %s74, 0
  %s77 = smul.u32 2, %s76
  %p78 = scmp.lt.s32.totalorder %s77, 1
  %s79 = scalar_select %p78, %s77, 1
  %s80 = smul.addr %s79, 8
  %s81 = scalar_lea.vmem %s0, %s80
  %s82 = sadd.s32 0, 0
  %p83 = scmp.lt.s32.totalorder %s82, 0
  %s84 = scalar_select %p83, %s82, 0
  %s85 = smul.u32 2, %s84
  %s86 = sadd.s32 0, 0
  %p87 = scmp.lt.s32.totalorder %s86, 0
  %s88 = scalar_select %p87, %s86, 0
  %s89 = smul.u32 2, %s88
  %p90 = scmp.lt.s32.totalorder %s89, 1
  %s91 = scalar_select %p90, %s89, 1
  %s92 = smul.addr %s91, 8
  %s93 = scalar_lea.vmem %s1, %s92
  %s94 = sadd.s32 0, 0
  %p95 = scmp.lt.s32.totalorder %s94, 0
  %s96 = scalar_select %p95, %s94, 0
  %s97 = smul.u32 2, %s96
  %s98 = sadd.s32 0, 0
  %p99 = scmp.lt.s32.totalorder %s98, 0
  %s100 = scalar_select %p99, %s98, 0
  %s101 = smul.u32 2, %s100
  %p102 = scmp.lt.s32.totalorder %s101, 1
  %s103 = scalar_select %p102, %s101, 1
  %s104 = smul.addr %s103, 8
  %s105 = scalar_lea.vmem %s2, %s104
  %s106 = sadd.s32 0, 0
  %p107 = scmp.lt.s32.totalorder %s106, 0
  %s108 = scalar_select %p107, %s106, 0
  %s109 = smul.u32 2, %s108
  %p110 = scmp.eq.s32.totalorder 0, 0
  // Predicated region
  $region14: #{_lambda_.4} parent=0 // pred_check
    %p111 = pneg %p110
  $region15: #{_lambda_.4} parent=0 // pred_check_branch
    %113 = sbr.rel (%p111) target = $region17
  $region16: #{_lambda_.4} parent=0 // pred_region
    %114 = vst [vmem:[%s3] sm:$0xff] 0.0
    %115 = vst [vmem:[%s3 + $0x8] sm:$0xf] 0.0
    %116 = vst [vmem:[%s3 + $0x10] sm:$0xff] 0.0
    %117 = vst [vmem:[%s3 + $0x18] sm:$0xf] 0.0
    %118 = vst [vmem:[%s3 + $0x20] sm:$0xff] 0.0
    %119 = vst [vmem:[%s3 + $0x28] sm:$0xf] 0.0
    %120 = vst [vmem:[%s3 + $0x30] sm:$0xff] 0.0
    %121 = vst [vmem:[%s3 + $0x38] sm:$0xf] 0.0
  $region17: #{_lambda_.4} parent=0 // pred_fallthru
    _
  %v122 = vld [vmem:[%s81] sm:$0xff]
  %v123 = vld [vmem:[%s81 + $0x8] sm:$0xf]
  %v124 = vld [vmem:[%s93] sm:$0xff]
  %v125 = vld [vmem:[%s93 + $0x8] sm:$0xf]
  %v126 = vsub.f32 %v122, %v124
  %v127 = vsub.f32 %v123, %v125
  %v128 = vmul.f32 %v126, %v126
  %v129 = vmul.f32 %v127, %v127
  %v130 = vld [vmem:[%s105] sm:$0xff]
  %v131 = vld [vmem:[%s105 + $0x8] sm:$0xf]
  %v132 = vmul.f32 %v130, %v128
  %v133 = vmul.f32 %v131, %v129
  %vm134 = vcmp.gt.f32.partialorder %v130, 0.0
  %vm135 = vcmp.gt.f32.partialorder %v131, 0.0
  %v136 = vld [vmem:[%s3] sm:$0xff]
  %v137 = vld [vmem:[%s3 + $0x8] sm:$0xf]
  %v138 = vsel %vm134, %v132, 0.0
  %v139 = vsel %vm135, %v133, 0.0
  %v140 = vadd.f32 %v138, 0.0
  %v141 = vadd.f32 %v139, 0.0
  %v142 = vadd.f32 %v136, %v140
  %v143 = vadd.f32 %v137, %v141
  %144 = vst [vmem:[%s3] sm:$0xff] %v142
  %145 = vst [vmem:[%s3 + $0x8] sm:$0xf] %v143
  %s146 = scalar_lea.vmem %s3, 16
  %v147 = vld [vmem:[%s146] sm:$0xff]
  %v148 = vld [vmem:[%s146 + $0x8] sm:$0xf]
  %v149 = vsel %vm134, 1.0, 0.0
  %v150 = vsel %vm135, 1.0, 0.0
  %v151 = vadd.f32 %v149, 0.0
  %v152 = vadd.f32 %v150, 0.0
  %v153 = vadd.f32 %v147, %v151
  %v154 = vadd.f32 %v148, %v152
  %155 = vst [vmem:[%s146] sm:$0xff] %v153
  %156 = vst [vmem:[%s146 + $0x8] sm:$0xf] %v154
  %s157 = scalar_lea.vmem %s3, 32
  %v158 = vld [vmem:[%s157] sm:$0xff]
  %v159 = vld [vmem:[%s157 + $0x8] sm:$0xf]
  %v160 = vadd.f32 %v132, 0.0
  %v161 = vadd.f32 %v133, 0.0
  %v162 = vadd.f32 %v158, %v160
  %v163 = vadd.f32 %v159, %v161
  %164 = vst [vmem:[%s157] sm:$0xff] %v162
  %165 = vst [vmem:[%s157 + $0x8] sm:$0xf] %v163
  %s166 = scalar_lea.vmem %s3, 48
  %v167 = vld [vmem:[%s166] sm:$0xff]
  %v168 = vld [vmem:[%s166 + $0x8] sm:$0xf]
  %vm169 = vcmp.ne.f32.partialorder %v132, 0.0
  %vm170 = vcmp.ne.f32.partialorder %v133, 0.0
  %v171 = vsel %vm169, 1.0, 0.0
  %v172 = vsel %vm170, 1.0, 0.0
  %v173 = vadd.f32 %v171, 0.0
  %v174 = vadd.f32 %v172, 0.0
  %v175 = vadd.f32 %v167, %v173
  %v176 = vadd.f32 %v168, %v174
  %177 = vst [vmem:[%s166] sm:$0xff] %v175
  %178 = vst [vmem:[%s166 + $0x8] sm:$0xf] %v176
  // Predicated region
  $region18: #{_lambda_.4} parent=0 // pred_check
    _
  $region19: #{_lambda_.4} parent=0 // pred_check_branch
    %180 = sbr.rel (0) target = $region21
  $region20: #{_lambda_.4} parent=0 // pred_region
    _
  $region21: #{_lambda_.4} parent=0 // pred_fallthru
    _
  // Predicated region
  $region22: #{_lambda_.4} parent=0 // pred_check
    _
  $region23: #{_lambda_.4} parent=0 // pred_check_branch
    %182 = sbr.rel (0) target = $region25
  $region24: #{_lambda_.4} parent=0 // pred_region
    _
  $region25: #{_lambda_.4} parent=0 // pred_fallthru
    _

// kernel: _lambda_.5
$region0: #{_lambda_.5}
  #allocation0 [shape = 'u32[]', space=smem, size = 0x4, offset = 0x4, fixed_abs, tag = 'smem constant byte address 0x4 - core index']
  #allocation1 [shape = 'u32[144,128]{1,0:T(1,128)}', space=vmem, size = 0x12000, scoped, tag = 'internal scratch']
  %s0 = inlined_call_operand.vmem [shape: f32[2,256], index: 0, kind: input, shape index: {}]
  %s1 = inlined_call_operand.vmem [shape: f32[2,256], index: 1, kind: input, shape index: {}]
  %s2 = inlined_call_operand.vmem [shape: f32[1,256], index: 2, kind: input, shape index: {}]
  %s3 = inlined_call_operand.vmem [shape: f32[2,2,128], index: 3, kind: output, shape index: {}]
  %s4 = sld [smem:[#allocation0]]
  $region26: #{_lambda_.5} parent=0
    _
  %s6 = ssub.s32 1, %s4
  %s7 = scalar_select 0, %s6, %s4
  // Predicated region
  $region2: #{_lambda_.5} parent=0 // pred_check
    _
  $region3: #{_lambda_.5} parent=0 // pred_check_branch
    %9 = sbr.rel (0) target = $region5
  $region4: #{_lambda_.5} parent=0 // pred_region
    _
  $region5: #{_lambda_.5} parent=0 // pred_fallthru
    _
  // Predicated region
  $region6: #{_lambda_.5} parent=0 // pred_check
    _
  $region7: #{_lambda_.5} parent=0 // pred_check_branch
    %11 = sbr.rel (0) target = $region9
  $region8: #{_lambda_.5} parent=0 // pred_region
    _
  $region9: #{_lambda_.5} parent=0 // pred_fallthru
    _
  // Predicated region
  $region10: #{_lambda_.5} parent=0 // pred_check
    _
  $region11: #{_lambda_.5} parent=0 // pred_check_branch
    %13 = sbr.rel (0) target = $region13
  $region12: #{_lambda_.5} parent=0 // pred_region
    _
  $region13: #{_lambda_.5} parent=0 // pred_fallthru
    _
  %p14 = scmp.eq.s32.totalorder 0, 0
  // Predicated region
  $region14: #{_lambda_.5} parent=0 // pred_check
    %p15 = pneg %p14
  $region15: #{_lambda_.5} parent=0 // pred_check_branch
    %17 = sbr.rel (%p15) target = $region17
  $region16: #{_lambda_.5} parent=0 // pred_region
    %18 = vst [vmem:[%s3] sm:$0x3] 0.0
    %19 = vst [vmem:[%s3 + $0x2] sm:$0x3] 0.0
  $region17: #{_lambda_.5} parent=0 // pred_fallthru
    _
  %v20 = vld [vmem:[%s2] sm:$0x3]
  %v21 = vld [vmem:[%s0] sm:$0xf]
  %v23 = vlaneseq
  %v24 = vshrl.u32 %v23, 7
  %v25 = vsub.s32 0, %v24
  %v26 = vrot.slane %v20, %v25
  %v27 = vlaneseq
  %v28 = vshrl.u32 %v27, 7
  %v29 = vsub.s32 1, %v28
  %v30 = vrot.slane %v20, %v29
  %v31 = vcombine.low %v26, %v30
  %v33 = vunpack.c.l.s4 1983009808
  %v34 = vunpack.c.0.s8 %v33
  %v35 = vlaneseq
  %v36 = vshrl.u32 %v35, 7
  %v37 = vsub.s32 %v34, %v36
  %v38 = vrot.slane %v31, %v37
  %v40 = vmul.f32 %v21, %v38
  %v41 = vld [vmem:[%s1] sm:$0xf]
  %v42 = vmul.f32 %v41, %v38
  %v44 = vrot.slane %v40, 2
  %v46 = vadd.f32 %v40, %v44
  %v48 = vrot.slane %v42, 2
  %v50 = vadd.f32 %v42, %v48
  %v51 = vld [vmem:[%s3] sm:$0x3]
  %v52 = vadd.f32 %v51, %v46
  %53 = vst [vmem:[%s3] sm:$0x3] %v52
  %s54 = scalar_lea.vmem %s3, 2
  %v55 = vld [vmem:[%s54] sm:$0x3]
  %v56 = vadd.f32 %v55, %v50
  %57 = vst [vmem:[%s54] sm:$0x3] %v56
  // Predicated region
  $region18: #{_lambda_.5} parent=0 // pred_check
    _
  $region19: #{_lambda_.5} parent=0 // pred_check_branch
    %59 = sbr.rel (0) target = $region21
  $region20: #{_lambda_.5} parent=0 // pred_region
    _
  $region21: #{_lambda_.5} parent=0 // pred_fallthru
    _
  // Predicated region
  $region22: #{_lambda_.5} parent=0 // pred_check
    _
  $region23: #{_lambda_.5} parent=0 // pred_check_branch
    %61 = sbr.rel (0) target = $region25
  $region24: #{_lambda_.5} parent=0 // pred_region
    _
  $region25: #{_lambda_.5} parent=0 // pred_fallthru
    _

</llo_original>
